<compile_context>
chip_gen: v7x
topology: tpu7x:2x2x1
jax: 0.10.0
libtpu: 0.0.40
codegen_flags: <defaults>
</compile_context>

<pallas_src>
import functools

import jax
import jax.numpy as jnp
from jax import lax
from jax.experimental import pallas as pl
from jax.experimental.pallas import tpu as pltpu


def _round_up(x, m):
    return ((x + m - 1) // m) * m


def _pad2(x, rows, cols):
    pr, pc = rows - x.shape[0], cols - x.shape[1]
    if pr or pc:
        x = jnp.pad(x, ((0, pr), (0, pc)))
    return x


def _interval_dense_kernel(c_ref, e_ref, w_ref, b_ref, l_ref, u_ref,
                           c_acc, e_acc):
    """One (tm, tn, tk) grid step of interval propagation through a dense layer.

    c_ref : [tm, tk]  center tile
    e_ref : [tm, tk]  error-radius tile (assumed element-wise non-negative)
    w_ref : [tn, tk]  weight tile in nn.Linear [out, in] layout
    b_ref : [1,  tn]  bias tile
    l_ref, u_ref : [tm, tn] lower / upper bound outputs
    c_acc, e_acc : [tm, tn] f32 VMEM accumulators (persist across the K axis)
    """
    k = pl.program_id(2)

    @pl.when(k == 0)
    def _():
        c_acc[...] = jnp.zeros_like(c_acc)
        e_acc[...] = jnp.zeros_like(e_acc)

    w = w_ref[...]                                     # [tn, tk]
    dims = (((1,), (1,)), ((), ()))                    # contract K, no batch
    c_acc[...] += lax.dot_general(c_ref[...], w, dims,
                                  preferred_element_type=jnp.float32)
    e_acc[...] += lax.dot_general(e_ref[...], jnp.abs(w), dims,
                                  preferred_element_type=jnp.float32)

    @pl.when(k == pl.num_programs(2) - 1)
    def _():
        c_new = c_acc[...] + b_ref[...]                # bias broadcasts [1, tn]
        e_new = e_acc[...]
        l_ref[...] = (c_new - e_new).astype(l_ref.dtype)
        u_ref[...] = (c_new + e_new).astype(u_ref.dtype)


def _vmem_budget_bytes(tm, tn, tk, in_bytes):
    # double-buffered inputs (c, e, w, bias) + double-buffered outputs (l, u)
    # + two f32 accumulators + one |W| tile temp, with 1.5x headroom.
    in_bufs = 2 * (2 * tm * tk + tn * tk + tn) * in_bytes
    out_bufs = 2 * 2 * tm * tn * 4
    scratch = 2 * tm * tn * 4
    temps = tn * tk * in_bytes
    total = int(1.5 * (in_bufs + out_bufs + scratch + temps))
    return min(max(total, 16 * 1024 * 1024), 100 * 1024 * 1024)


def interval_dense(c, e, weight, bias, wc_matrix=None, use_bf16_matmul=False):
    """Pallas equivalent of Interval_Dense.forward on an `Interval(c, e)` input.

    c, e    : [B, in_features]   (e is assumed element-wise non-negative,
                                  matching the PyTorch Interval precondition)
    weight  : [out_features, in_features]   (torch.nn.Linear convention)
    bias    : [out_features]
    wc_matrix (optional): [m, out_features] — folded into an effective
        weight/bias exactly like the PyTorch branch (abs of the folded weight).
    Returns (lower, upper), i.e. the arguments of ix.update_lu.
    """
    if wc_matrix is not None:
        # Parameter-setup glue; matches: weight = wc @ W ; bias = wc @ b.
        weight = wc_matrix @ weight
        bias = wc_matrix @ bias

    B, Kin = c.shape
    Nout = weight.shape[0]
    out_dtype = c.dtype

    # Tile selection: 8-aligned batch (sublane), 128-aligned out/in (lane),
    # capped at MXU-friendly sizes that comfortably fit v5e/v6e/v7x VMEM.
    tm = min(256, _round_up(B, 8))
    tn = min(512, _round_up(Nout, 128))
    tk = min(512, _round_up(Kin, 128))

    Bp = _round_up(B, tm)
    Np = _round_up(Nout, tn)
    Kp = _round_up(Kin, tk)

    mat_dtype = jnp.bfloat16 if use_bf16_matmul else c.dtype
    cp = _pad2(c.astype(mat_dtype), Bp, Kp)
    ep = _pad2(e.astype(mat_dtype), Bp, Kp)
    wp = _pad2(weight.astype(mat_dtype), Np, Kp)
    bp = _pad2(bias.reshape(1, Nout).astype(jnp.float32), 1, Np)

    grid = (Bp // tm, Np // tn, Kp // tk)
    out_sds = jax.ShapeDtypeStruct((Bp, Np), jnp.float32)
    in_bytes = 2 if use_bf16_matmul else 4

    lo, hi = pl.pallas_call(
        _interval_dense_kernel,
        out_shape=(out_sds, out_sds),
        grid_spec=pltpu.PrefetchScalarGridSpec(
            num_scalar_prefetch=0,
            grid=grid,
            in_specs=[
                pl.BlockSpec((tm, tk), lambda i, j, k: (i, k)),   # c
                pl.BlockSpec((tm, tk), lambda i, j, k: (i, k)),   # e
                pl.BlockSpec((tn, tk), lambda i, j, k: (j, k)),   # W [out, in]
                pl.BlockSpec((1, tn), lambda i, j, k: (0, j)),    # bias
            ],
            out_specs=(
                pl.BlockSpec((tm, tn), lambda i, j, k: (i, j)),   # lower
                pl.BlockSpec((tm, tn), lambda i, j, k: (i, j)),   # upper
            ),
            scratch_shapes=[
                pltpu.VMEM((tm, tn), jnp.float32),                # c accumulator
                pltpu.VMEM((tm, tn), jnp.float32),                # e accumulator
            ],
        ),
        compiler_params=pltpu.CompilerParams(
            dimension_semantics=("parallel", "parallel", "arbitrary"),
            vmem_limit_bytes=_vmem_budget_bytes(tm, tn, tk, in_bytes),
        ),
    )(cp, ep, wp, bp)

    lo = lo[:B, :Nout].astype(out_dtype)
    hi = hi[:B, :Nout].astype(out_dtype)
    return lo, hi


# TODO(synk): the Symbolic_interval / mix_interval / *_proj branches rely on
# container classes (idep/edep lists, concretize()) defined outside this
# module; their hot path is the same dense-linear propagation applied
# per-tensor with the kernel above.


def _reference(c, e, weight, bias, wc_matrix=None):
    if wc_matrix is not None:
        weight = wc_matrix @ weight
        bias = wc_matrix @ bias
    prec = jax.lax.Precision.HIGHEST
    c_new = jnp.dot(c, weight.T, precision=prec) + bias
    e_new = jnp.dot(e, jnp.abs(weight).T, precision=prec)
    return c_new - e_new, c_new + e_new


def _check(got, want, atol, rtol, name):
    assert got[0].shape == want[0].shape and got[1].shape == want[1].shape, name
    assert jnp.allclose(got[0], want[0], atol=atol, rtol=rtol), f"{name}: lower mismatch"
    assert jnp.allclose(got[1], want[1], atol=atol, rtol=rtol), f"{name}: upper mismatch"


if __name__ == "__main__":
    key = jax.random.PRNGKey(0)

    # Case 1: small shapes consistent with the module (single-tile grid).
    k1, k2, k3, k4, key = jax.random.split(key, 5)
    B, IN, OUT = 8, 32, 32
    c = jax.random.normal(k1, (B, IN), dtype=jnp.float32)
    e = jnp.abs(jax.random.normal(k2, (B, IN), dtype=jnp.float32))
    weight = jax.random.normal(k3, (OUT, IN), dtype=jnp.float32) * 0.1
    bias = jax.random.normal(k4, (OUT,), dtype=jnp.float32) * 0.1
    got = jax.block_until_ready(interval_dense(c, e, weight, bias))
    _check(got, _reference(c, e, weight, bias), 1e-4, 1e-4, "small")

    # Case 2: wc_matrix folding (Interval branch with wc_matrix).
    k5, key = jax.random.split(key)
    wc = jax.random.normal(k5, (16, OUT), dtype=jnp.float32) * 0.1
    got = jax.block_until_ready(interval_dense(c, e, weight, bias, wc_matrix=wc))
    _check(got, _reference(c, e, weight, bias, wc_matrix=wc), 1e-4, 1e-4, "wc_matrix")

    # Case 3: multi-tile grid with padding (exercises M/N parallel + K accumulation).
    k6, k7, k8, k9, key = jax.random.split(key, 5)
    B2, IN2, OUT2 = 384, 1024, 640
    c2 = jax.random.normal(k6, (B2, IN2), dtype=jnp.float32)
    e2 = jnp.abs(jax.random.normal(k7, (B2, IN2), dtype=jnp.float32))
    w2 = jax.random.normal(k8, (OUT2, IN2), dtype=jnp.float32) * 0.05
    b2 = jax.random.normal(k9, (OUT2,), dtype=jnp.float32) * 0.05
    got2 = jax.block_until_ready(interval_dense(c2, e2, w2, b2))
    _check(got2, _reference(c2, e2, w2, b2), 2e-3, 2e-3, "tiled")

    print("KERNEL_OK")
</pallas_src>

<mosaic_0001>
module attributes {stable_mosaic.version = 11 : i64} {
  func.func @_interval_dense_kernel(%arg0: i32, %arg1: i32, %arg2: i32, %arg3: memref<8x128xf32, #tpu.memory_space<vmem>>, %arg4: memref<8x128xf32, #tpu.memory_space<vmem>>, %arg5: memref<128x128xf32, #tpu.memory_space<vmem>>, %arg6: memref<1x128xf32, #tpu.memory_space<vmem>>, %arg7: memref<8x128xf32, #tpu.memory_space<vmem>>, %arg8: memref<8x128xf32, #tpu.memory_space<vmem>>, %arg9: memref<8x128xf32, #tpu.memory_space<vmem>>, %arg10: memref<8x128xf32, #tpu.memory_space<vmem>>) attributes {dimension_semantics = [#tpu.dimension_semantics<parallel>, #tpu.dimension_semantics<parallel>, #tpu.dimension_semantics<arbitrary>], iteration_bounds = array<i64: 1, 1, 1>, scalar_prefetch = 0 : i64, scratch_operands = 2 : i64, tpu.core_type = #tpu.core_type<tc>, window_params = [{transform_indices = @transform_0, window_bounds = array<i64: 8, 128>}, {transform_indices = @transform_1, window_bounds = array<i64: 8, 128>}, {transform_indices = @transform_2, window_bounds = array<i64: 128, 128>}, {transform_indices = @transform_3, window_bounds = array<i64: 1, 128>}, {transform_indices = @transform_4, window_bounds = array<i64: 8, 128>}, {transform_indices = @transform_5, window_bounds = array<i64: 8, 128>}]} {
    %c0_i32 = arith.constant 0 : i32
    %0 = arith.cmpi eq, %arg2, %c0_i32 : i32
    %1 = arith.extui %0 : i1 to i32
    %c0_i32_0 = arith.constant 0 : i32
    %2 = arith.cmpi ne, %1, %c0_i32_0 : i32
    scf.if %2 {
      %cst_17 = arith.constant 0.000000e+00 : f32
      %18 = vector.broadcast %cst_17 : f32 to vector<8x128xf32>
      %c0_18 = arith.constant 0 : index
      %c0_19 = arith.constant 0 : index
      %19 = vector.load %arg9[%c0_18, %c0_19] : memref<8x128xf32, #tpu.memory_space<vmem>>, vector<8x128xf32>
      tpu.vector_store %arg9[%c0_18, %c0_19], %18 {strides = array<i32>} : memref<8x128xf32, #tpu.memory_space<vmem>>, vector<8x128xf32>,
      %cst_20 = arith.constant 0.000000e+00 : f32
      %20 = vector.broadcast %cst_20 : f32 to vector<8x128xf32>
      %c0_21 = arith.constant 0 : index
      %c0_22 = arith.constant 0 : index
      %21 = vector.load %arg10[%c0_21, %c0_22] : memref<8x128xf32, #tpu.memory_space<vmem>>, vector<8x128xf32>
      tpu.vector_store %arg10[%c0_21, %c0_22], %20 {strides = array<i32>} : memref<8x128xf32, #tpu.memory_space<vmem>>, vector<8x128xf32>,
    } else {
    }
    %c0 = arith.constant 0 : index
    %c0_1 = arith.constant 0 : index
    %3 = vector.load %arg5[%c0, %c0_1] : memref<128x128xf32, #tpu.memory_space<vmem>>, vector<128x128xf32>
    %c0_2 = arith.constant 0 : index
    %c0_3 = arith.constant 0 : index
    %4 = vector.load %arg9[%c0_2, %c0_3] : memref<8x128xf32, #tpu.memory_space<vmem>>, vector<8x128xf32>
    %c0_4 = arith.constant 0 : index
    %c0_5 = arith.constant 0 : index
    %5 = vector.load %arg3[%c0_4, %c0_5] : memref<8x128xf32, #tpu.memory_space<vmem>>, vector<8x128xf32>
    %cst = arith.constant dense<0.000000e+00> : vector<8x128xf32>
    %6 = tpu.matmul %5, %3, %cst {dimension_numbers = #tpu.dot_dimension_numbers<[1], [1], [0], [0], [0, 0, 1, 0], [], []>} : vector<8x128xf32>, vector<128x128xf32>, vector<8x128xf32> -> vector<8x128xf32>
    %7 = arith.addf %4, %6 : vector<8x128xf32>
    %c0_6 = arith.constant 0 : index
    %c0_7 = arith.constant 0 : index
    %8 = vector.load %arg9[%c0_6, %c0_7] : memref<8x128xf32, #tpu.memory_space<vmem>>, vector<8x128xf32>
    tpu.vector_store %arg9[%c0_6, %c0_7], %7 {strides = array<i32>} : memref<8x128xf32, #tpu.memory_space<vmem>>, vector<8x128xf32>,
    %c0_8 = arith.constant 0 : index
    %c0_9 = arith.constant 0 : index
    %9 = vector.load %arg10[%c0_8, %c0_9] : memref<8x128xf32, #tpu.memory_space<vmem>>, vector<8x128xf32>
    %c0_10 = arith.constant 0 : index
    %c0_11 = arith.constant 0 : index
    %10 = vector.load %arg4[%c0_10, %c0_11] : memref<8x128xf32, #tpu.memory_space<vmem>>, vector<8x128xf32>
    %11 = math.absf %3 : vector<128x128xf32>
    %cst_12 = arith.constant dense<0.000000e+00> : vector<8x128xf32>
    %12 = tpu.matmul %10, %11, %cst_12 {dimension_numbers = #tpu.dot_dimension_numbers<[1], [1], [0], [0], [0, 0, 1, 0], [], []>} : vector<8x128xf32>, vector<128x128xf32>, vector<8x128xf32> -> vector<8x128xf32>
    %13 = arith.addf %9, %12 : vector<8x128xf32>
    %c0_13 = arith.constant 0 : index
    %c0_14 = arith.constant 0 : index
    %14 = vector.load %arg10[%c0_13, %c0_14] : memref<8x128xf32, #tpu.memory_space<vmem>>, vector<8x128xf32>
    tpu.vector_store %arg10[%c0_13, %c0_14], %13 {strides = array<i32>} : memref<8x128xf32, #tpu.memory_space<vmem>>, vector<8x128xf32>,
    %c0_i32_15 = arith.constant 0 : i32
    %15 = arith.cmpi eq, %arg2, %c0_i32_15 : i32
    %16 = arith.extui %15 : i1 to i32
    %c0_i32_16 = arith.constant 0 : i32
    %17 = arith.cmpi ne, %16, %c0_i32_16 : i32
    scf.if %17 {
      %c0_17 = arith.constant 0 : index
      %c0_18 = arith.constant 0 : index
      %18 = vector.load %arg9[%c0_17, %c0_18] : memref<8x128xf32, #tpu.memory_space<vmem>>, vector<8x128xf32>
      %c0_19 = arith.constant 0 : index
      %c0_20 = arith.constant 0 : index
      %19 = vector.load %arg6[%c0_19, %c0_20] : memref<1x128xf32, #tpu.memory_space<vmem>>, vector<1x128xf32>
      %20 = vector.broadcast %19 : vector<1x128xf32> to vector<8x128xf32>
      %21 = arith.addf %18, %20 : vector<8x128xf32>
      %c0_21 = arith.constant 0 : index
      %c0_22 = arith.constant 0 : index
      %22 = vector.load %arg10[%c0_21, %c0_22] : memref<8x128xf32, #tpu.memory_space<vmem>>, vector<8x128xf32>
      %23 = arith.subf %21, %22 : vector<8x128xf32>
      %c0_23 = arith.constant 0 : index
      %c0_24 = arith.constant 0 : index
      %24 = vector.load %arg7[%c0_23, %c0_24] : memref<8x128xf32, #tpu.memory_space<vmem>>, vector<8x128xf32>
      tpu.vector_store %arg7[%c0_23, %c0_24], %23 {strides = array<i32>} : memref<8x128xf32, #tpu.memory_space<vmem>>, vector<8x128xf32>,
      %25 = arith.addf %21, %22 : vector<8x128xf32>
      %c0_25 = arith.constant 0 : index
      %c0_26 = arith.constant 0 : index
      %26 = vector.load %arg8[%c0_25, %c0_26] : memref<8x128xf32, #tpu.memory_space<vmem>>, vector<8x128xf32>
      tpu.vector_store %arg8[%c0_25, %c0_26], %25 {strides = array<i32>} : memref<8x128xf32, #tpu.memory_space<vmem>>, vector<8x128xf32>,
    } else {
    }
    return
  }
  func.func @transform_0(%arg0: i32, %arg1: i32, %arg2: i32) -> (i32, i32) {
    %c0_i32 = arith.constant 0 : i32
    return %arg0, %arg2 : i32, i32
  }
  func.func @transform_1(%arg0: i32, %arg1: i32, %arg2: i32) -> (i32, i32) {
    %c0_i32 = arith.constant 0 : i32
    return %arg0, %arg2 : i32, i32
  }
  func.func @transform_2(%arg0: i32, %arg1: i32, %arg2: i32) -> (i32, i32) {
    %c0_i32 = arith.constant 0 : i32
    return %arg1, %arg2 : i32, i32
  }
  func.func @transform_3(%arg0: i32, %arg1: i32, %arg2: i32) -> (i32, i32) {
    %c0_i32 = arith.constant 0 : i32
    %c0_i32_0 = arith.constant 0 : i32
    return %c0_i32, %arg1 : i32, i32
  }
  func.func @transform_4(%arg0: i32, %arg1: i32, %arg2: i32) -> (i32, i32) {
    %c0_i32 = arith.constant 0 : i32
    return %arg0, %arg1 : i32, i32
  }
  func.func @transform_5(%arg0: i32, %arg1: i32, %arg2: i32) -> (i32, i32) {
    %c0_i32 = arith.constant 0 : i32
    return %arg0, %arg1 : i32, i32
  }
}

</mosaic_0001>

<llo_original>
// kernel: tpu_custom_call.1
$region0: #{tpu_custom_call.1}
  #allocation0 [shape = 'u32[]', space=smem, size = 0x4, offset = 0x4, fixed_abs, tag = 'smem constant byte address 0x4 - core index']
  #allocation1 [shape = 'u32[144,128]{1,0:T(1,128)}', space=vmem, size = 0x12000, scoped, tag = 'internal scratch']
  #allocation2 [shape = 'f32[8,128]{1,0:T(8,128)}', space=vmem, size = 0x1000, scoped, tag = 'scratch operand']
  #allocation3 [shape = 'f32[8,128]{1,0:T(8,128)}', space=vmem, size = 0x1000, scoped, tag = 'scratch operand']
  %s0 = inlined_call_operand.hbm [shape: f32[8,128], index: 0, kind: input, shape index: {}]
  %s1 = inlined_call_operand.hbm [shape: f32[8,128], index: 1, kind: input, shape index: {}]
  %s2 = inlined_call_operand.hbm [shape: f32[128,128], index: 2, kind: input, shape index: {}]
  %s3 = inlined_call_operand.vmem [shape: f32[1,128], index: 3, kind: input, shape index: {}]
  %s4 = inlined_call_operand.hbm [shape: f32[8,128], index: 4, kind: output, shape index: {0}]
  %s5 = inlined_call_operand.hbm [shape: f32[8,128], index: 5, kind: output, shape index: {1}]
  %6 = xla_tuple %s4, %s5
  %s7 = sld [smem:[#allocation0]]
  $region54: #{tpu_custom_call.1} parent=0
    _
  %s9 = ssub.s32 1, %s7
  %s10 = scalar_select 0, %s9, %s7
  $region1: #{tpu_custom_call.1} parent=0
    #allocation4 [shape = 'u8[4096]{0}', space=vmem, size = 0x1000, scoped, tag = 'input window, operand 0, single buffered']
    #allocation5 [shape = 's32[1]{0}', space=sflag, size = 0x4, scoped, tag = 'scoped memory for tpu_custom_call.1']
    #allocation6 [shape = 's32[1]{0}', space=sflag, size = 0x4, scoped, tag = 'scoped memory for tpu_custom_call.1']
    #allocation7 [shape = 'u8[4096]{0}', space=vmem, size = 0x1000, scoped, tag = 'input window, operand 1, single buffered']
    #allocation8 [shape = 's32[1]{0}', space=sflag, size = 0x4, scoped, tag = 'scoped memory for tpu_custom_call.1']
    #allocation9 [shape = 'u8[65536]{0}', space=vmem, size = 0x10000, scoped, tag = 'input window, operand 2, single buffered']
    #allocation10 [shape = 'u8[4096]{0}', space=vmem, size = 0x1000, scoped, tag = 'output window, operand 0, single buffered']
    #allocation11 [shape = 'u8[4096]{0}', space=vmem, size = 0x1000, scoped, tag = 'output window, operand 1, single buffered']
    #allocation12 [shape = 's32[1]{0}', space=sflag, size = 0x4, scoped, tag = 'scoped memory for tpu_custom_call.1']
    %11 = vsyncpa [#allocation5], 0
    %12 = vsyncpa [#allocation8], 0
    %13 = vsyncpa [#allocation6], 0
    %14 = vsyncpa [#allocation12], 0
    // Predicated region
    $region2: #{tpu_custom_call.1} parent=1 // pred_check
      _
    $region3: #{tpu_custom_call.1} parent=1 // pred_check_branch
      %16 = sbr.rel (0) target = $region5
    $region4: #{tpu_custom_call.1} parent=1 // pred_region
      %s18 = ssub.s32 128, 128
      %19 = vsyncadd [#allocation5], %s18
      %s21 = sshll.u32 [#allocation4], 4
      %s22 = int_to_ptr.vmem [resolvable:$true] %s21
      %24 = dma.hbm_to_vmem [thread:$0]  %s0, 128, %s22, [#allocation5]
    $region5: #{tpu_custom_call.1} parent=1 // pred_fallthru
      _
    // Predicated region
    $region6: #{tpu_custom_call.1} parent=1 // pred_check
      _
    $region7: #{tpu_custom_call.1} parent=1 // pred_check_branch
      %26 = sbr.rel (0) target = $region9
    $region8: #{tpu_custom_call.1} parent=1 // pred_region
      %s28 = ssub.s32 128, 128
      %29 = vsyncadd [#allocation8], %s28
      %s31 = sshll.u32 [#allocation7], 4
      %s32 = int_to_ptr.vmem [resolvable:$true] %s31
      %34 = dma.hbm_to_vmem [thread:$0]  %s1, 128, %s32, [#allocation8]
    $region9: #{tpu_custom_call.1} parent=1 // pred_fallthru
      _
    // Predicated region
    $region10: #{tpu_custom_call.1} parent=1 // pred_check
      _
    $region11: #{tpu_custom_call.1} parent=1 // pred_check_branch
      %36 = sbr.rel (0) target = $region13
    $region12: #{tpu_custom_call.1} parent=1 // pred_region
      %s38 = ssub.s32 2048, 2048
      %39 = vsyncadd [#allocation8], %s38
      %s40 = sshll.u32 [#allocation9], 4
      %s41 = int_to_ptr.vmem [resolvable:$true] %s40
      %46 = dma.hbm_to_vmem [thread:$0]  %s2, 2048, %s41, [#allocation8], 128, 128, 8
    $region13: #{tpu_custom_call.1} parent=1 // pred_fallthru
      _
    // Predicated region
    $region14: #{tpu_custom_call.1} parent=1 // pred_check
      _
    $region15: #{tpu_custom_call.1} parent=1 // pred_check_branch
      %48 = sbr.rel (0) target = $region17
    $region16: #{tpu_custom_call.1} parent=1 // pred_region
      _
    $region17: #{tpu_custom_call.1} parent=1 // pred_fallthru
      _
    // Predicated region
    $region18: #{tpu_custom_call.1} parent=1 // pred_check
      _
    $region19: #{tpu_custom_call.1} parent=1 // pred_check_branch
      %50 = sbr.rel (0) target = $region21
    $region20: #{tpu_custom_call.1} parent=1 // pred_region
      %51 = dma.done [#allocation5], 128
    $region21: #{tpu_custom_call.1} parent=1 // pred_fallthru
      _
    // Predicated region
    $region22: #{tpu_custom_call.1} parent=1 // pred_check
      _
    $region23: #{tpu_custom_call.1} parent=1 // pred_check_branch
      %53 = sbr.rel (0) target = $region25
    $region24: #{tpu_custom_call.1} parent=1 // pred_region
      %54 = dma.done [#allocation8], 128
    $region25: #{tpu_custom_call.1} parent=1 // pred_fallthru
      _
    // Predicated region
    $region26: #{tpu_custom_call.1} parent=1 // pred_check
      _
    $region27: #{tpu_custom_call.1} parent=1 // pred_check_branch
      %56 = sbr.rel (0) target = $region29
    $region28: #{tpu_custom_call.1} parent=1 // pred_region
      %57 = dma.done [#allocation8], 2048
    $region29: #{tpu_custom_call.1} parent=1 // pred_fallthru
      _
    %p58 = scmp.eq.s32.totalorder 0, 0
    // Predicated region
    $region30: #{tpu_custom_call.1} parent=1 // pred_check
      %p59 = pneg %p58
    $region31: #{tpu_custom_call.1} parent=1 // pred_check_branch
      %61 = sbr.rel (%p59) target = $region33
    $region32: #{tpu_custom_call.1} parent=1 // pred_region
      %62 = vst [vmem:[#allocation2] sm:$0xff] 0.0
      %63 = vst [vmem:[#allocation3] sm:$0xff] 0.0
    $region33: #{tpu_custom_call.1} parent=1 // pred_fallthru
      _
    %v64 = vld [vmem:[#allocation9] sm:$0xff]
    %v65 = vld [vmem:[#allocation9 + $0x8] sm:$0xff]
    %v66 = vld [vmem:[#allocation9 + $0x10] sm:$0xff]
    %v67 = vld [vmem:[#allocation9 + $0x18] sm:$0xff]
    %v68 = vld [vmem:[#allocation9 + $0x20] sm:$0xff]
    %v69 = vld [vmem:[#allocation9 + $0x28] sm:$0xff]
    %v70 = vld [vmem:[#allocation9 + $0x30] sm:$0xff]
    %v71 = vld [vmem:[#allocation9 + $0x38] sm:$0xff]
    %v72 = vld [vmem:[#allocation9 + $0x40] sm:$0xff]
    %v73 = vld [vmem:[#allocation9 + $0x48] sm:$0xff]
    %v74 = vld [vmem:[#allocation9 + $0x50] sm:$0xff]
    %v75 = vld [vmem:[#allocation9 + $0x58] sm:$0xff]
    %v76 = vld [vmem:[#allocation9 + $0x60] sm:$0xff]
    %v77 = vld [vmem:[#allocation9 + $0x68] sm:$0xff]
    %v78 = vld [vmem:[#allocation9 + $0x70] sm:$0xff]
    %v79 = vld [vmem:[#allocation9 + $0x78] sm:$0xff]
    %v80 = vld [vmem:[#allocation2] sm:$0xff]
    %v81 = vld [vmem:[#allocation4] sm:$0xff]
    %82 = vmatprep.subr.mxu0 0.0
    %83 = vmatpush1.xpose.msra.mxu0 %v64
    %84 = vmatprep.subr.mxu0 0.0
    %85 = vmatpush1.xpose.msra.mxu0 %v65
    %86 = vmatprep.subr.mxu0 0.0
    %87 = vmatpush1.xpose.msra.mxu0 %v66
    %88 = vmatprep.subr.mxu0 0.0
    %89 = vmatpush1.xpose.msra.mxu0 %v67
    %90 = vmatprep.subr.mxu0 0.0
    %91 = vmatpush1.xpose.msra.mxu0 %v68
    %92 = vmatprep.subr.mxu0 0.0
    %93 = vmatpush1.xpose.msra.mxu0 %v69
    %94 = vmatprep.subr.mxu0 0.0
    %95 = vmatpush1.xpose.msra.mxu0 %v70
    %96 = vmatprep.subr.mxu0 0.0
    %97 = vmatpush1.xpose.msra.mxu0 %v71
    %98 = vmatprep.subr.mxu0 0.0
    %99 = vmatpush1.xpose.msra.mxu0 %v72
    %100 = vmatprep.subr.mxu0 0.0
    %101 = vmatpush1.xpose.msra.mxu0 %v73
    %102 = vmatprep.subr.mxu0 0.0
    %103 = vmatpush1.xpose.msra.mxu0 %v74
    %104 = vmatprep.subr.mxu0 0.0
    %105 = vmatpush1.xpose.msra.mxu0 %v75
    %106 = vmatprep.subr.mxu0 0.0
    %107 = vmatpush1.xpose.msra.mxu0 %v76
    %108 = vmatprep.subr.mxu0 0.0
    %109 = vmatpush1.xpose.msra.mxu0 %v77
    %110 = vmatprep.subr.mxu0 0.0
    %111 = vmatpush1.xpose.msra.mxu0 %v78
    %112 = vmatprep.subr.mxu0 0.0
    %113 = vmatpush1.xpose.msra.mxu0 %v79
    %114 = vmatprep.subr.mxu0 0.0
    %115 = vmatpush1.xpose.msra.mxu0 0.0
    %116 = vmatprep.subr.mxu0 0.0
    %117 = vmatpush1.xpose.msra.mxu0 0.0
    %118 = vmatprep.subr.mxu0 0.0
    %119 = vmatpush1.xpose.msra.mxu0 0.0
    %120 = vmatprep.subr.mxu0 0.0
    %121 = vmatpush1.xpose.msra.mxu0 0.0
    %122 = vmatprep.subr.mxu0 0.0
    %123 = vmatpush1.xpose.msra.mxu0 0.0
    %124 = vmatprep.subr.mxu0 0.0
    %125 = vmatpush1.xpose.msra.mxu0 0.0
    %126 = vmatprep.subr.mxu0 0.0
    %127 = vmatpush1.xpose.msra.mxu0 0.0
    %128 = vmatprep.subr.mxu0 0.0
    %129 = vmatpush1.xpose.msra.mxu0 0.0
    %130 = vmatprep.subr.mxu0 0.0
    %131 = vmatpush1.xpose.msra.mxu0 0.0
    %132 = vmatprep.subr.mxu0 0.0
    %133 = vmatpush1.xpose.msra.mxu0 0.0
    %134 = vmatprep.subr.mxu0 0.0
    %135 = vmatpush1.xpose.msra.mxu0 0.0
    %136 = vmatprep.subr.mxu0 0.0
    %137 = vmatpush1.xpose.msra.mxu0 0.0
    %138 = vmatprep.subr.mxu0 0.0
    %139 = vmatpush1.xpose.msra.mxu0 0.0
    %140 = vmatprep.subr.mxu0 0.0
    %141 = vmatpush1.xpose.msra.mxu0 0.0
    %142 = vmatprep.subr.mxu0 0.0
    %143 = vmatpush1.xpose.msra.mxu0 0.0
    %144 = vmatprep.subr.mxu0 0.0
    %145 = vmatpush1.xpose.msra.mxu0 0.0
    %146 = vmatprep.mubr.f32.mxu0 0.0
    %147 = vmatmul.mubr.f32.gmra.mrb[0].mxu0 %v81
    %v148 = vpop.f32.mrb[0].mxu0
    %v149 = vadd.f32 0.0, %v148
    %v150 = vpop.f32.mrb[0].mxu0
    %151 = vdwg.mxu0
    %v152 = vadd.f32 %v80, %v149
    %153 = vst [vmem:[#allocation2] sm:$0xff] %v152
    %v154 = vld [vmem:[#allocation3] sm:$0xff]
    %v155 = vld [vmem:[#allocation7] sm:$0xff]
    %v156 = vand.u32 2147483647, %v64
    %v157 = vand.u32 2147483647, %v65
    %v158 = vand.u32 2147483647, %v66
    %v159 = vand.u32 2147483647, %v67
    %v160 = vand.u32 2147483647, %v68
    %v161 = vand.u32 2147483647, %v69
    %v162 = vand.u32 2147483647, %v70
    %v163 = vand.u32 2147483647, %v71
    %v164 = vand.u32 2147483647, %v72
    %v165 = vand.u32 2147483647, %v73
    %v166 = vand.u32 2147483647, %v74
    %v167 = vand.u32 2147483647, %v75
    %v168 = vand.u32 2147483647, %v76
    %v169 = vand.u32 2147483647, %v77
    %v170 = vand.u32 2147483647, %v78
    %v171 = vand.u32 2147483647, %v79
    %172 = vmatprep.subr.mxu0 0.0
    %173 = vmatpush1.xpose.msra.mxu0 %v156
    %174 = vmatprep.subr.mxu0 0.0
    %175 = vmatpush1.xpose.msra.mxu0 %v157
    %176 = vmatprep.subr.mxu0 0.0
    %177 = vmatpush1.xpose.msra.mxu0 %v158
    %178 = vmatprep.subr.mxu0 0.0
    %179 = vmatpush1.xpose.msra.mxu0 %v159
    %180 = vmatprep.subr.mxu0 0.0
    %181 = vmatpush1.xpose.msra.mxu0 %v160
    %182 = vmatprep.subr.mxu0 0.0
    %183 = vmatpush1.xpose.msra.mxu0 %v161
    %184 = vmatprep.subr.mxu0 0.0
    %185 = vmatpush1.xpose.msra.mxu0 %v162
    %186 = vmatprep.subr.mxu0 0.0
    %187 = vmatpush1.xpose.msra.mxu0 %v163
    %188 = vmatprep.subr.mxu0 0.0
    %189 = vmatpush1.xpose.msra.mxu0 %v164
    %190 = vmatprep.subr.mxu0 0.0
    %191 = vmatpush1.xpose.msra.mxu0 %v165
    %192 = vmatprep.subr.mxu0 0.0
    %193 = vmatpush1.xpose.msra.mxu0 %v166
    %194 = vmatprep.subr.mxu0 0.0
    %195 = vmatpush1.xpose.msra.mxu0 %v167
    %196 = vmatprep.subr.mxu0 0.0
    %197 = vmatpush1.xpose.msra.mxu0 %v168
    %198 = vmatprep.subr.mxu0 0.0
    %199 = vmatpush1.xpose.msra.mxu0 %v169
    %200 = vmatprep.subr.mxu0 0.0
    %201 = vmatpush1.xpose.msra.mxu0 %v170
    %202 = vmatprep.subr.mxu0 0.0
    %203 = vmatpush1.xpose.msra.mxu0 %v171
    %204 = vmatprep.subr.mxu0 0.0
    %205 = vmatpush1.xpose.msra.mxu0 0.0
    %206 = vmatprep.subr.mxu0 0.0
    %207 = vmatpush1.xpose.msra.mxu0 0.0
    %208 = vmatprep.subr.mxu0 0.0
    %209 = vmatpush1.xpose.msra.mxu0 0.0
    %210 = vmatprep.subr.mxu0 0.0
    %211 = vmatpush1.xpose.msra.mxu0 0.0
    %212 = vmatprep.subr.mxu0 0.0
    %213 = vmatpush1.xpose.msra.mxu0 0.0
    %214 = vmatprep.subr.mxu0 0.0
    %215 = vmatpush1.xpose.msra.mxu0 0.0
    %216 = vmatprep.subr.mxu0 0.0
    %217 = vmatpush1.xpose.msra.mxu0 0.0
    %218 = vmatprep.subr.mxu0 0.0
    %219 = vmatpush1.xpose.msra.mxu0 0.0
    %220 = vmatprep.subr.mxu0 0.0
    %221 = vmatpush1.xpose.msra.mxu0 0.0
    %222 = vmatprep.subr.mxu0 0.0
    %223 = vmatpush1.xpose.msra.mxu0 0.0
    %224 = vmatprep.subr.mxu0 0.0
    %225 = vmatpush1.xpose.msra.mxu0 0.0
    %226 = vmatprep.subr.mxu0 0.0
    %227 = vmatpush1.xpose.msra.mxu0 0.0
    %228 = vmatprep.subr.mxu0 0.0
    %229 = vmatpush1.xpose.msra.mxu0 0.0
    %230 = vmatprep.subr.mxu0 0.0
    %231 = vmatpush1.xpose.msra.mxu0 0.0
    %232 = vmatprep.subr.mxu0 0.0
    %233 = vmatpush1.xpose.msra.mxu0 0.0
    %234 = vmatprep.subr.mxu0 0.0
    %235 = vmatpush1.xpose.msra.mxu0 0.0
    %236 = vmatprep.mubr.f32.mxu0 0.0
    %237 = vmatmul.mubr.f32.gmra.mrb[0].mxu0 %v155
    %v238 = vpop.f32.mrb[0].mxu0
    %v239 = vadd.f32 0.0, %v238
    %v240 = vpop.f32.mrb[0].mxu0
    %241 = vdwg.mxu0
    %v242 = vadd.f32 %v154, %v239
    %243 = vst [vmem:[#allocation3] sm:$0xff] %v242
    // Predicated region
    $region34: #{tpu_custom_call.1} parent=1 // pred_check
      %p244 = pneg %p58
    $region35: #{tpu_custom_call.1} parent=1 // pred_check_branch
      %246 = sbr.rel (%p244) target = $region37
    $region36: #{tpu_custom_call.1} parent=1 // pred_region
      %v247 = vld [vmem:[#allocation2] sm:$0xff]
      %v248 = vld [vmem:[%s3] sm:$0x1]
      %v250 = vlaneseq
      %v251 = vshrl.u32 %v250, 7
      %v252 = vsub.s32 0, %v251
      %v253 = vrot.slane %v248, %v252
      %v255 = vadd.f32 %v247, %v253
      %v256 = vld [vmem:[#allocation3] sm:$0xff]
      %v257 = vsub.f32 %v255, %v256
      %258 = vst [vmem:[#allocation10] sm:$0xff] %v257
      %v259 = vadd.f32 %v255, %v256
      %260 = vst [vmem:[#allocation11] sm:$0xff] %v259
    $region37: #{tpu_custom_call.1} parent=1 // pred_fallthru
      _
    // Predicated region
    $region38: #{tpu_custom_call.1} parent=1 // pred_check
      _
    $region39: #{tpu_custom_call.1} parent=1 // pred_check_branch
      %262 = sbr.rel (0) target = $region41
    $region40: #{tpu_custom_call.1} parent=1 // pred_region
      %s264 = ssub.s32 128, 128
      %265 = vsyncadd [#allocation6], %s264
      %s267 = sshll.u32 [#allocation10], 4
      %s268 = int_to_ptr.vmem [resolvable:$true] %s267
      %270 = dma.vmem_to_hbm [thread:$0]  %s268, 128, %s4, [#allocation6]
    $region41: #{tpu_custom_call.1} parent=1 // pred_fallthru
      _
    // Predicated region
    $region42: #{tpu_custom_call.1} parent=1 // pred_check
      _
    $region43: #{tpu_custom_call.1} parent=1 // pred_check_branch
      %272 = sbr.rel (0) target = $region45
    $region44: #{tpu_custom_call.1} parent=1 // pred_region
      %s274 = ssub.s32 128, 128
      %275 = vsyncadd [#allocation12], %s274
      %s277 = sshll.u32 [#allocation11], 4
      %s278 = int_to_ptr.vmem [resolvable:$true] %s277
      %280 = dma.vmem_to_hbm [thread:$0]  %s278, 128, %s5, [#allocation12]
    $region45: #{tpu_custom_call.1} parent=1 // pred_fallthru
      _
    // Predicated region
    $region46: #{tpu_custom_call.1} parent=1 // pred_check
      _
    $region47: #{tpu_custom_call.1} parent=1 // pred_check_branch
      %282 = sbr.rel (0) target = $region49
    $region48: #{tpu_custom_call.1} parent=1 // pred_region
      %283 = dma.done [#allocation6], 128
    $region49: #{tpu_custom_call.1} parent=1 // pred_fallthru
      _
    // Predicated region
    $region50: #{tpu_custom_call.1} parent=1 // pred_check
      _
    $region51: #{tpu_custom_call.1} parent=1 // pred_check_branch
      %285 = sbr.rel (0) target = $region53
    $region52: #{tpu_custom_call.1} parent=1 // pred_region
      %286 = dma.done [#allocation12], 128
    $region53: #{tpu_custom_call.1} parent=1 // pred_fallthru
      _
    %287 = vsyncpa [#allocation5], 1
    %288 = vsyncpa [#allocation8], 1
    %289 = vsyncpa [#allocation6], 1
    %290 = vsyncpa [#allocation12], 1

</llo_original>
